<compile_context>
chip_gen: v7x
topology: tpu7x:2x2x1
jax: 0.10.0
libtpu: 0.0.40
codegen_flags: <defaults>
</compile_context>

<pallas_src>
import functools

import jax
import jax.numpy as jnp
from jax.experimental import pallas as pl
from jax.experimental.pallas import tpu as pltpu


def _round_up(v: int, m: int) -> int:
    return ((v + m - 1) // m) * m


def _nbytes(a) -> int:
    return int(a.size) * a.dtype.itemsize


def _vmem_budget_bytes() -> int:
    """Scoped-VMEM request: ~15% headroom below physical, capped at 100 MiB."""
    try:
        cap = int(getattr(pltpu.get_tpu_info(), "vmem_capacity_bytes", 0)) or (64 * 2**20)
    except Exception:  # pragma: no cover - conservative fallback off-TPU
        cap = 64 * 2**20
    return int(min(0.85 * cap, 100 * 2**20))


def _pick_tile(m8: int, fixed_bytes: int, per_row_bytes: int, budget: int) -> int:
    """Largest batch tile (multiple of 128, or whole small batch) that fits VMEM."""
    if m8 <= 128:
        return m8
    for tm in (1024, 512, 256, 128):
        if tm <= m8 and fixed_bytes + tm * per_row_bytes <= budget:
            return tm
    return 128


# ---------------------------------------------------------------------------
# Resident-weights path: grid = (batch_tiles,), all layers fused in one step.
# ---------------------------------------------------------------------------

def _make_resident_kernel(n_mid: int):
    def body(x_ref, wf_ref, bf_ref, wm_ref, bm_ref, wl_ref, bl_ref, o_ref, h_ref):
        # Layer 0: (tm, P_in) @ (P_in, P_h); bias + ReLU in f32 vregs, one bf16 store.
        y = jnp.dot(x_ref[...], wf_ref[...], preferred_element_type=jnp.float32)
        h_ref[...] = jnp.maximum(y + bf_ref[...], 0.0).astype(h_ref.dtype)
        # Middle hidden layers: weights resident in VMEM, statically unrolled.
        for l in range(n_mid):
            y = jnp.dot(h_ref[...], wm_ref[l], preferred_element_type=jnp.float32)
            h_ref[...] = jnp.maximum(y + bm_ref[l], 0.0).astype(h_ref.dtype)
        # Final linear (no ReLU): write the f32 output tile directly.
        y = jnp.dot(h_ref[...], wl_ref[...], preferred_element_type=jnp.float32)
        o_ref[...] = (y + bl_ref[...]).astype(o_ref.dtype)

    if n_mid > 0:
        def kernel(x_ref, wf_ref, bf_ref, wm_ref, bm_ref, wl_ref, bl_ref, o_ref, h_ref):
            body(x_ref, wf_ref, bf_ref, wm_ref, bm_ref, wl_ref, bl_ref, o_ref, h_ref)
    else:
        def kernel(x_ref, wf_ref, bf_ref, wl_ref, bl_ref, o_ref, h_ref):
            body(x_ref, wf_ref, bf_ref, None, None, wl_ref, bl_ref, o_ref, h_ref)
    return kernel


def _forward_resident(packed, x, output_size: int, budget: int):
    M, in_f = x.shape
    m8 = _round_up(max(M, 1), 8)

    wf, bf_, wl, bl = packed["wf"], packed["bf"], packed["wl"], packed["bl"]
    has_mid = "wm" in packed
    wm = packed.get("wm")
    bm = packed.get("bm")
    n_mid = int(wm.shape[0]) if has_mid else 0
    P_in, P_h = wf.shape
    P_out = wl.shape[1]

    w_nbytes = sum(_nbytes(a) for a in (wf, bf_, wl, bl))
    if has_mid:
        w_nbytes += _nbytes(wm) + _nbytes(bm)

    # Constant-index blocks are still double-buffered -> budget 2x weights.
    fixed = 2 * w_nbytes + (2 << 20)
    per_row = 2 * P_in * 2 + 2 * P_out * 4 + P_h * 2
    tm = _pick_tile(m8, fixed, per_row, budget)
    Mp = _round_up(m8, tm)
    n_m = Mp // tm

    xp = jnp.zeros((Mp, P_in), jnp.bfloat16).at[:M, :in_f].set(x.astype(jnp.bfloat16))

    in_specs = [
        pl.BlockSpec((tm, P_in), lambda m: (m, 0)),        # x: tiled over batch
        pl.BlockSpec((P_in, P_h), lambda m: (0, 0)),        # first-layer W (resident)
        pl.BlockSpec((1, P_h), lambda m: (0, 0)),           # first-layer b
    ]
    args = [xp, wf, bf_]
    if has_mid:
        in_specs += [
            pl.BlockSpec((n_mid, P_h, P_h), lambda m: (0, 0, 0)),  # middle W stack
            pl.BlockSpec((n_mid, 1, P_h), lambda m: (0, 0, 0)),    # middle b stack
        ]
        args += [wm, bm]
    in_specs += [
        pl.BlockSpec((P_h, P_out), lambda m: (0, 0)),        # final W (resident)
        pl.BlockSpec((1, P_out), lambda m: (0, 0)),           # final b
    ]
    args += [wl, bl]

    flops = 2 * Mp * (P_in * P_h + n_mid * P_h * P_h + P_h * P_out)
    bytes_accessed = _nbytes(xp) + w_nbytes + Mp * P_out * 4  # weights read once

    out_p = pl.pallas_call(
        _make_resident_kernel(n_mid),
        out_shape=jax.ShapeDtypeStruct((Mp, P_out), jnp.float32),
        grid_spec=pltpu.PrefetchScalarGridSpec(
            num_scalar_prefetch=0,
            grid=(n_m,),
            in_specs=in_specs,
            out_specs=pl.BlockSpec((tm, P_out), lambda m: (m, 0)),
            scratch_shapes=[pltpu.VMEM((tm, P_h), jnp.bfloat16)],  # running activation
        ),
        compiler_params=pltpu.CompilerParams(
            dimension_semantics=("parallel",),
            vmem_limit_bytes=budget,
        ),
        cost_estimate=pl.CostEstimate(
            flops=flops, transcendentals=0, bytes_accessed=bytes_accessed),
    )(*args)

    return out_p[:M, :output_size]


# ---------------------------------------------------------------------------
# Streamed fallback path: grid = (batch_tiles, layers), per-layer weight DMA.
# ---------------------------------------------------------------------------

def _mlp_streamed_kernel(x_ref, w_ref, b_ref, o_ref, h_ref):
    layer = pl.program_id(1)
    n_layers = pl.num_programs(1)

    @pl.when(layer == 0)
    def _():
        h_ref[...] = x_ref[...]

    # bf16 x bf16 MXU matmul, f32 accumulate; bias in f32 vregs.
    y = jnp.dot(h_ref[...], w_ref[...], preferred_element_type=jnp.float32) + b_ref[...]

    @pl.when(layer < n_layers - 1)
    def _():
        h_ref[...] = jnp.maximum(y, 0.0).astype(h_ref.dtype)   # single store per layer

    @pl.when(layer == n_layers - 1)
    def _():
        o_ref[...] = y.astype(o_ref.dtype)                      # final layer: no ReLU


def _forward_streamed(packed, x, output_size: int, budget: int):
    M, in_f = x.shape
    m8 = _round_up(max(M, 1), 8)

    ws, bs = packed["ws"], packed["bs"]
    L, P, _ = ws.shape

    fixed = 2 * (P * P * 2 + P * 4) + (2 << 20)     # double-buffered per-layer W/b
    per_row = 2 * P * 2 + 2 * P * 4 + P * 2          # x dbuf (bf16) + out dbuf (f32) + scratch
    tm = _pick_tile(m8, fixed, per_row, budget)
    Mp = _round_up(m8, tm)
    n_m = Mp // tm

    xp = jnp.zeros((Mp, P), jnp.bfloat16).at[:M, :in_f].set(x.astype(jnp.bfloat16))

    flops = 2 * Mp * P * P * L
    bytes_accessed = _nbytes(xp) + n_m * (_nbytes(ws) + _nbytes(bs)) + Mp * P * 4

    out_p = pl.pallas_call(
        _mlp_streamed_kernel,
        out_shape=jax.ShapeDtypeStruct((Mp, P), jnp.float32),
        grid_spec=pltpu.PrefetchScalarGridSpec(
            num_scalar_prefetch=0,
            grid=(n_m, L),                                   # layer axis innermost
            in_specs=[
                pl.BlockSpec((tm, P), lambda m, l: (m, 0)),       # x (resident per m-tile)
                pl.BlockSpec((None, P, P), lambda m, l: (l, 0, 0)),  # layer W (streamed)
                pl.BlockSpec((None, 1, P), lambda m, l: (l, 0, 0)),  # layer b
            ],
            out_specs=pl.BlockSpec((tm, P), lambda m, l: (m, 0)),
            scratch_shapes=[pltpu.VMEM((tm, P), jnp.bfloat16)],   # running activation
        ),
        compiler_params=pltpu.CompilerParams(
            dimension_semantics=("parallel", "arbitrary"),
            vmem_limit_bytes=budget,
        ),
        cost_estimate=pl.CostEstimate(
            flops=flops, transcendentals=0, bytes_accessed=bytes_accessed),
    )(xp, ws, bs)

    return out_p[:M, :output_size]


# ---------------------------------------------------------------------------
# Parameter init / one-time packing / forward.
# ---------------------------------------------------------------------------

def init_mlp_params(key, input_size, hidden_size, output_size, num_layers=1):
    """nn.Linear default init U(-1/sqrt(fan_in), +1/sqrt(fan_in)); W is [in, out]."""
    sizes = []
    in_f = input_size
    for _ in range(num_layers):
        sizes.append((in_f, hidden_size))
        in_f = hidden_size
    sizes.append((in_f, output_size))

    params = []
    for fan_in, fan_out in sizes:
        key, kw, kb = jax.random.split(key, 3)
        bound = 1.0 / float(fan_in) ** 0.5
        w = jax.random.uniform(kw, (fan_in, fan_out), jnp.float32, -bound, bound)
        b = jax.random.uniform(kb, (fan_out,), jnp.float32, -bound, bound)
        params.append((w, b))
    return params


def prepare_params(params, *, force_streamed=False):
    """One-time packing: pad per-layer to (8,128) tiles, cast W to bf16, stack.

    Returns a dict consumed by mlp_forward; resident layout if the whole weight
    stack fits the VMEM budget, otherwise a uniformly padded streamed layout.
    """
    n_total = len(params)
    n_hidden = n_total - 1
    budget = _vmem_budget_bytes()

    in_size = params[0][0].shape[0]
    out_size = params[-1][0].shape[1]

    use_resident = (not force_streamed) and n_hidden >= 1
    if use_resident:
        hid = params[0][0].shape[1]
        P_in, P_h, P_out = (_round_up(d, 128) for d in (in_size, hid, out_size))
        n_mid = n_hidden - 1
        w_bytes = 2 * (P_in * P_h * 2 + P_h * 4
                       + n_mid * (P_h * P_h * 2 + P_h * 4)
                       + P_h * P_out * 2 + P_out * 4)
        act_bytes = 128 * (2 * P_in * 2 + 2 * P_out * 4 + P_h * 2)
        if w_bytes + act_bytes + (2 << 20) > budget:
            use_resident = False

    if use_resident:
        w0, b0 = params[0]
        wl_raw, bl_raw = params[-1]
        wf = jnp.zeros((P_in, P_h), jnp.bfloat16).at[
            :w0.shape[0], :w0.shape[1]].set(w0.astype(jnp.bfloat16))
        bf_ = jnp.zeros((1, P_h), jnp.float32).at[0, :b0.shape[0]].set(
            b0.astype(jnp.float32))
        wl = jnp.zeros((P_h, P_out), jnp.bfloat16).at[
            :wl_raw.shape[0], :wl_raw.shape[1]].set(wl_raw.astype(jnp.bfloat16))
        bl = jnp.zeros((1, P_out), jnp.float32).at[0, :bl_raw.shape[0]].set(
            bl_raw.astype(jnp.float32))
        packed = {"wf": wf, "bf": bf_, "wl": wl, "bl": bl}
        if n_mid > 0:
            wm = jnp.zeros((n_mid, P_h, P_h), jnp.bfloat16)
            bm = jnp.zeros((n_mid, 1, P_h), jnp.float32)
            for i in range(n_mid):
                w, b = params[1 + i]
                wm = wm.at[i, :w.shape[0], :w.shape[1]].set(w.astype(jnp.bfloat16))
                bm = bm.at[i, 0, :b.shape[0]].set(b.astype(jnp.float32))
            packed["wm"] = wm
            packed["bm"] = bm
        return packed

    # Streamed layout (uniform padding across layers).
    dims = [in_size] + [w.shape[1] for w, _ in params]
    P = _round_up(max(dims), 128)
    ws = jnp.zeros((n_total, P, P), jnp.bfloat16)
    bs = jnp.zeros((n_total, 1, P), jnp.float32)
    for i, (w, b) in enumerate(params):
        ws = ws.at[i, :w.shape[0], :w.shape[1]].set(w.astype(jnp.bfloat16))
        bs = bs.at[i, 0, :b.shape[0]].set(b.astype(jnp.float32))
    return {"ws": ws, "bs": bs}


def mlp_forward(packed, x, *, output_size):
    """Fused feedforward: (Linear -> ReLU) * num_layers, then final Linear."""
    budget = _vmem_budget_bytes()
    if "ws" in packed:
        return _forward_streamed(packed, x, output_size, budget)
    return _forward_resident(packed, x, output_size, budget)


# ---------------------------------------------------------------------------
# Self-test.
# ---------------------------------------------------------------------------

if __name__ == "__main__":
    def ref_forward(params, x):
        h = x
        for i, (w, b) in enumerate(params):
            h = h @ w + b
            if i != len(params) - 1:
                h = jnp.maximum(h, 0.0)
        return h

    def check(key, batch, input_size, hidden_size, output_size, num_layers,
              force_streamed):
        key, kx, kp = jax.random.split(key, 3)
        x = jax.random.normal(kx, (batch, input_size), jnp.float32)
        params = init_mlp_params(kp, input_size, hidden_size, output_size, num_layers)
        packed = prepare_params(params, force_streamed=force_streamed)

        fwd = jax.jit(functools.partial(mlp_forward, output_size=output_size))
        out = jax.block_until_ready(fwd(packed, x))

        ref = ref_forward(params, x)
        assert out.shape == (batch, output_size)
        err = float(jnp.max(jnp.abs(out - ref)))
        # Tolerance covers the intentional bf16 weight/activation rounding.
        assert jnp.allclose(out, ref, atol=2e-2, rtol=2e-2), err
        return key

    key = jax.random.PRNGKey(0)
    # Resident-weights fused path (first + middle + final layers).
    key = check(key, batch=8, input_size=32, hidden_size=64, output_size=16,
                num_layers=2, force_streamed=False)
    # Resident path with no middle layers (num_layers=1, ragged batch).
    key = check(key, batch=6, input_size=32, hidden_size=64, output_size=16,
                num_layers=1, force_streamed=False)
    # Streamed fallback path, multiple batch tiles (grid = (2, 3)).
    key = check(key, batch=160, input_size=32, hidden_size=64, output_size=16,
                num_layers=2, force_streamed=True)

    print("KERNEL_OK")
</pallas_src>

<mosaic_0001>
module attributes {stable_mosaic.version = 11 : i64} {
  func.func @kernel(%arg0: i32, %arg1: memref<8x128xbf16, #tpu.memory_space<vmem>>, %arg2: memref<128x128xbf16, #tpu.memory_space<vmem>>, %arg3: memref<1x128xf32, #tpu.memory_space<vmem>>, %arg4: memref<1x128x128xbf16, #tpu.memory_space<vmem>>, %arg5: memref<1x1x128xf32, #tpu.memory_space<vmem>>, %arg6: memref<128x128xbf16, #tpu.memory_space<vmem>>, %arg7: memref<1x128xf32, #tpu.memory_space<vmem>>, %arg8: memref<8x128xf32, #tpu.memory_space<vmem>>, %arg9: memref<8x128xbf16, #tpu.memory_space<vmem>>) attributes {dimension_semantics = [#tpu.dimension_semantics<parallel>], iteration_bounds = array<i64: 1>, scalar_prefetch = 0 : i64, scratch_operands = 1 : i64, tpu.core_type = #tpu.core_type<tc>, window_params = [{transform_indices = @transform_0, window_bounds = array<i64: 8, 128>}, {pipeline_mode = #tpu.pipeline_mode<synchronous>, transform_indices = @transform_1, window_bounds = array<i64: 128, 128>}, {pipeline_mode = #tpu.pipeline_mode<synchronous>, transform_indices = @transform_2, window_bounds = array<i64: 1, 128>}, {pipeline_mode = #tpu.pipeline_mode<synchronous>, transform_indices = @transform_3, window_bounds = array<i64: 1, 128, 128>}, {pipeline_mode = #tpu.pipeline_mode<synchronous>, transform_indices = @transform_4, window_bounds = array<i64: 1, 1, 128>}, {pipeline_mode = #tpu.pipeline_mode<synchronous>, transform_indices = @transform_5, window_bounds = array<i64: 128, 128>}, {pipeline_mode = #tpu.pipeline_mode<synchronous>, transform_indices = @transform_6, window_bounds = array<i64: 1, 128>}, {transform_indices = @transform_7, window_bounds = array<i64: 8, 128>}]} {
    %c0 = arith.constant 0 : index
    %c0_0 = arith.constant 0 : index
    %0 = vector.load %arg1[%c0, %c0_0] : memref<8x128xbf16, #tpu.memory_space<vmem>>, vector<8x128xbf16>
    %c0_1 = arith.constant 0 : index
    %c0_2 = arith.constant 0 : index
    %1 = vector.load %arg2[%c0_1, %c0_2] : memref<128x128xbf16, #tpu.memory_space<vmem>>, vector<128x128xbf16>
    %cst = arith.constant dense<0.000000e+00> : vector<8x128xf32>
    %2 = tpu.matmul %0, %1, %cst {dimension_numbers = #tpu.dot_dimension_numbers<[1], [0], [0], [1], [0, 0, 1, 1], [], []>} : vector<8x128xbf16>, vector<128x128xbf16>, vector<8x128xf32> -> vector<8x128xf32>
    %c0_3 = arith.constant 0 : index
    %c0_4 = arith.constant 0 : index
    %3 = vector.load %arg3[%c0_3, %c0_4] : memref<1x128xf32, #tpu.memory_space<vmem>>, vector<1x128xf32>
    %4 = vector.broadcast %3 : vector<1x128xf32> to vector<8x128xf32>
    %5 = arith.addf %2, %4 : vector<8x128xf32>
    %cst_5 = arith.constant 0.000000e+00 : f32
    %6 = vector.broadcast %cst_5 : f32 to vector<8x128xf32>
    %7 = arith.maximumf %5, %6 : vector<8x128xf32>
    %8 = arith.truncf %7 : vector<8x128xf32> to vector<8x128xbf16>
    %c0_6 = arith.constant 0 : index
    %c0_7 = arith.constant 0 : index
    %9 = vector.load %arg9[%c0_6, %c0_7] : memref<8x128xbf16, #tpu.memory_space<vmem>>, vector<8x128xbf16>
    tpu.vector_store %arg9[%c0_6, %c0_7], %8 {strides = array<i32>} : memref<8x128xbf16, #tpu.memory_space<vmem>>, vector<8x128xbf16>,
    %c0_8 = arith.constant 0 : index
    %c0_9 = arith.constant 0 : index
    %10 = vector.load %arg9[%c0_8, %c0_9] : memref<8x128xbf16, #tpu.memory_space<vmem>>, vector<8x128xbf16>
    %c0_10 = arith.constant 0 : index
    %c0_11 = arith.constant 0 : index
    %c0_12 = arith.constant 0 : index
    %11 = vector.load %arg4[%c0_10, %c0_11, %c0_12] : memref<1x128x128xbf16, #tpu.memory_space<vmem>>, vector<1x128x128xbf16>
    %12 = vector.shape_cast %11 : vector<1x128x128xbf16> to vector<128x128xbf16>
    %cst_13 = arith.constant dense<0.000000e+00> : vector<8x128xf32>
    %13 = tpu.matmul %10, %12, %cst_13 {dimension_numbers = #tpu.dot_dimension_numbers<[1], [0], [0], [1], [0, 0, 1, 1], [], []>} : vector<8x128xbf16>, vector<128x128xbf16>, vector<8x128xf32> -> vector<8x128xf32>
    %c0_14 = arith.constant 0 : index
    %c0_15 = arith.constant 0 : index
    %c0_16 = arith.constant 0 : index
    %14 = vector.load %arg5[%c0_14, %c0_15, %c0_16] : memref<1x1x128xf32, #tpu.memory_space<vmem>>, vector<1x1x128xf32>
    %15 = vector.shape_cast %14 : vector<1x1x128xf32> to vector<1x128xf32>
    %16 = vector.broadcast %15 : vector<1x128xf32> to vector<8x128xf32>
    %17 = arith.addf %13, %16 : vector<8x128xf32>
    %cst_17 = arith.constant 0.000000e+00 : f32
    %18 = vector.broadcast %cst_17 : f32 to vector<8x128xf32>
    %19 = arith.maximumf %17, %18 : vector<8x128xf32>
    %20 = arith.truncf %19 : vector<8x128xf32> to vector<8x128xbf16>
    %c0_18 = arith.constant 0 : index
    %c0_19 = arith.constant 0 : index
    %21 = vector.load %arg9[%c0_18, %c0_19] : memref<8x128xbf16, #tpu.memory_space<vmem>>, vector<8x128xbf16>
    tpu.vector_store %arg9[%c0_18, %c0_19], %20 {strides = array<i32>} : memref<8x128xbf16, #tpu.memory_space<vmem>>, vector<8x128xbf16>,
    %c0_20 = arith.constant 0 : index
    %c0_21 = arith.constant 0 : index
    %22 = vector.load %arg9[%c0_20, %c0_21] : memref<8x128xbf16, #tpu.memory_space<vmem>>, vector<8x128xbf16>
    %c0_22 = arith.constant 0 : index
    %c0_23 = arith.constant 0 : index
    %23 = vector.load %arg6[%c0_22, %c0_23] : memref<128x128xbf16, #tpu.memory_space<vmem>>, vector<128x128xbf16>
    %cst_24 = arith.constant dense<0.000000e+00> : vector<8x128xf32>
    %24 = tpu.matmul %22, %23, %cst_24 {dimension_numbers = #tpu.dot_dimension_numbers<[1], [0], [0], [1], [0, 0, 1, 1], [], []>} : vector<8x128xbf16>, vector<128x128xbf16>, vector<8x128xf32> -> vector<8x128xf32>
    %c0_25 = arith.constant 0 : index
    %c0_26 = arith.constant 0 : index
    %25 = vector.load %arg7[%c0_25, %c0_26] : memref<1x128xf32, #tpu.memory_space<vmem>>, vector<1x128xf32>
    %26 = vector.broadcast %25 : vector<1x128xf32> to vector<8x128xf32>
    %27 = arith.addf %24, %26 : vector<8x128xf32>
    %c0_27 = arith.constant 0 : index
    %c0_28 = arith.constant 0 : index
    %28 = vector.load %arg8[%c0_27, %c0_28] : memref<8x128xf32, #tpu.memory_space<vmem>>, vector<8x128xf32>
    tpu.vector_store %arg8[%c0_27, %c0_28], %27 {strides = array<i32>} : memref<8x128xf32, #tpu.memory_space<vmem>>, vector<8x128xf32>,
    return
  }
  func.func @transform_0(%arg0: i32) -> (i32, i32) {
    %c0_i32 = arith.constant 0 : i32
    %c0_i32_0 = arith.constant 0 : i32
    return %arg0, %c0_i32 : i32, i32
  }
  func.func @transform_1(%arg0: i32) -> (i32, i32) {
    %c0_i32 = arith.constant 0 : i32
    %c0_i32_0 = arith.constant 0 : i32
    %c0_i32_1 = arith.constant 0 : i32
    return %c0_i32, %c0_i32_0 : i32, i32
  }
  func.func @transform_2(%arg0: i32) -> (i32, i32) {
    %c0_i32 = arith.constant 0 : i32
    %c0_i32_0 = arith.constant 0 : i32
    %c0_i32_1 = arith.constant 0 : i32
    return %c0_i32, %c0_i32_0 : i32, i32
  }
  func.func @transform_3(%arg0: i32) -> (i32, i32, i32) {
    %c0_i32 = arith.constant 0 : i32
    %c0_i32_0 = arith.constant 0 : i32
    %c0_i32_1 = arith.constant 0 : i32
    %c0_i32_2 = arith.constant 0 : i32
    return %c0_i32, %c0_i32_0, %c0_i32_1 : i32, i32, i32
  }
  func.func @transform_4(%arg0: i32) -> (i32, i32, i32) {
    %c0_i32 = arith.constant 0 : i32
    %c0_i32_0 = arith.constant 0 : i32
    %c0_i32_1 = arith.constant 0 : i32
    %c0_i32_2 = arith.constant 0 : i32
    return %c0_i32, %c0_i32_0, %c0_i32_1 : i32, i32, i32
  }
  func.func @transform_5(%arg0: i32) -> (i32, i32) {
    %c0_i32 = arith.constant 0 : i32
    %c0_i32_0 = arith.constant 0 : i32
    %c0_i32_1 = arith.constant 0 : i32
    return %c0_i32, %c0_i32_0 : i32, i32
  }
  func.func @transform_6(%arg0: i32) -> (i32, i32) {
    %c0_i32 = arith.constant 0 : i32
    %c0_i32_0 = arith.constant 0 : i32
    %c0_i32_1 = arith.constant 0 : i32
    return %c0_i32, %c0_i32_0 : i32, i32
  }
  func.func @transform_7(%arg0: i32) -> (i32, i32) {
    %c0_i32 = arith.constant 0 : i32
    %c0_i32_0 = arith.constant 0 : i32
    return %arg0, %c0_i32 : i32, i32
  }
}

</mosaic_0001>

<llo_original>
// kernel: mlp_forward.1
$region0: #{mlp_forward.1}
  #allocation0 [shape = 'u32[]', space=smem, size = 0x4, offset = 0x4, fixed_abs, tag = 'smem constant byte address 0x4 - core index']
  #allocation1 [shape = 'u32[144,128]{1,0:T(1,128)}', space=vmem, size = 0x12000, scoped, tag = 'internal scratch']
  #allocation2 [shape = 'bf16[8,128]{1,0:T(8,128)(2,1)}', space=vmem, size = 0x800, scoped, tag = 'scratch operand']
  %s0 = inlined_call_operand.vmem [shape: bf16[8,128], index: 0, kind: input, shape index: {}]
  %s1 = inlined_call_operand.hbm [shape: bf16[128,128], index: 1, kind: input, shape index: {}]
  %s2 = inlined_call_operand.vmem [shape: f32[1,128], index: 2, kind: input, shape index: {}]
  %s3 = inlined_call_operand.hbm [shape: bf16[1,128,128], index: 3, kind: input, shape index: {}]
  %s4 = inlined_call_operand.vmem [shape: f32[1,1,128], index: 4, kind: input, shape index: {}]
  %s5 = inlined_call_operand.hbm [shape: bf16[128,128], index: 5, kind: input, shape index: {}]
  %s6 = inlined_call_operand.vmem [shape: f32[1,128], index: 6, kind: input, shape index: {}]
  %s7 = inlined_call_operand.hbm [shape: f32[8,128], index: 7, kind: output, shape index: {}]
  %s8 = sld [smem:[#allocation0]]
  $region50: #{mlp_forward.1} parent=0
    _
  %s10 = ssub.s32 1, %s8
  %s11 = scalar_select 0, %s10, %s8
  $region1: #{mlp_forward.1} parent=0
    #allocation3 [shape = 'u8[32768]{0}', space=vmem, size = 0x8000, scoped, tag = 'input window, operand 1, single buffered']
    #allocation4 [shape = 's32[1]{0}', space=sflag, size = 0x4, scoped, tag = 'scoped memory for mlp_forward.1']
    #allocation5 [shape = 's32[1]{0}', space=sflag, size = 0x4, scoped, tag = 'scoped memory for mlp_forward.1']
    #allocation6 [shape = 'u8[32768]{0}', space=vmem, size = 0x8000, scoped, tag = 'input window, operand 3, single buffered']
    #allocation7 [shape = 's32[1]{0}', space=sflag, size = 0x4, scoped, tag = 'scoped memory for mlp_forward.1']
    #allocation8 [shape = 'u8[32768]{0}', space=vmem, size = 0x8000, scoped, tag = 'input window, operand 5, single buffered']
    #allocation9 [shape = 'u8[4096]{0}', space=vmem, size = 0x1000, scoped, tag = 'output window, operand 0, single buffered']
    %12 = vsyncpa [#allocation4], 0
    %13 = vsyncpa [#allocation7], 0
    %14 = vsyncpa [#allocation5], 0
    // Predicated region
    $region2: #{mlp_forward.1} parent=1 // pred_check
      _
    $region3: #{mlp_forward.1} parent=1 // pred_check_branch
      %16 = sbr.rel (0) target = $region5
    $region4: #{mlp_forward.1} parent=1 // pred_region
      _
    $region5: #{mlp_forward.1} parent=1 // pred_fallthru
      _
    // Predicated region
    $region6: #{mlp_forward.1} parent=1 // pred_check
      _
    $region7: #{mlp_forward.1} parent=1 // pred_check_branch
      %18 = sbr.rel (0) target = $region9
    $region8: #{mlp_forward.1} parent=1 // pred_region
      %s20 = ssub.s32 1024, 1024
      %21 = vsyncadd [#allocation4], %s20
      %s22 = sshll.u32 [#allocation3], 4
      %s23 = int_to_ptr.vmem [resolvable:$true] %s22
      %28 = dma.hbm_to_vmem [thread:$0]  %s1, 1024, %s23, [#allocation4], 64, 64, 4
    $region9: #{mlp_forward.1} parent=1 // pred_fallthru
      _
    // Predicated region
    $region10: #{mlp_forward.1} parent=1 // pred_check
      _
    $region11: #{mlp_forward.1} parent=1 // pred_check_branch
      %30 = sbr.rel (0) target = $region13
    $region12: #{mlp_forward.1} parent=1 // pred_region
      _
    $region13: #{mlp_forward.1} parent=1 // pred_fallthru
      _
    // Predicated region
    $region14: #{mlp_forward.1} parent=1 // pred_check
      _
    $region15: #{mlp_forward.1} parent=1 // pred_check_branch
      %32 = sbr.rel (0) target = $region17
    $region16: #{mlp_forward.1} parent=1 // pred_region
      %s34 = ssub.s32 1024, 1024
      %35 = vsyncadd [#allocation7], %s34
      %s36 = sshll.u32 [#allocation6], 4
      %s37 = int_to_ptr.vmem [resolvable:$true] %s36
      %42 = dma.hbm_to_vmem [thread:$0]  %s3, 1024, %s37, [#allocation7], 64, 64, 4
    $region17: #{mlp_forward.1} parent=1 // pred_fallthru
      _
    // Predicated region
    $region18: #{mlp_forward.1} parent=1 // pred_check
      _
    $region19: #{mlp_forward.1} parent=1 // pred_check_branch
      %44 = sbr.rel (0) target = $region21
    $region20: #{mlp_forward.1} parent=1 // pred_region
      _
    $region21: #{mlp_forward.1} parent=1 // pred_fallthru
      _
    // Predicated region
    $region22: #{mlp_forward.1} parent=1 // pred_check
      _
    $region23: #{mlp_forward.1} parent=1 // pred_check_branch
      %46 = sbr.rel (0) target = $region25
    $region24: #{mlp_forward.1} parent=1 // pred_region
      %s48 = ssub.s32 1024, 1024
      %49 = vsyncadd [#allocation7], %s48
      %s50 = sshll.u32 [#allocation8], 4
      %s51 = int_to_ptr.vmem [resolvable:$true] %s50
      %56 = dma.hbm_to_vmem [thread:$0]  %s5, 1024, %s51, [#allocation7], 64, 64, 4
    $region25: #{mlp_forward.1} parent=1 // pred_fallthru
      _
    // Predicated region
    $region26: #{mlp_forward.1} parent=1 // pred_check
      _
    $region27: #{mlp_forward.1} parent=1 // pred_check_branch
      %58 = sbr.rel (0) target = $region29
    $region28: #{mlp_forward.1} parent=1 // pred_region
      _
    $region29: #{mlp_forward.1} parent=1 // pred_fallthru
      _
    // Predicated region
    $region30: #{mlp_forward.1} parent=1 // pred_check
      _
    $region31: #{mlp_forward.1} parent=1 // pred_check_branch
      %60 = sbr.rel (0) target = $region33
    $region32: #{mlp_forward.1} parent=1 // pred_region
      %61 = dma.done [#allocation4], 1024
    $region33: #{mlp_forward.1} parent=1 // pred_fallthru
      _
    // Predicated region
    $region34: #{mlp_forward.1} parent=1 // pred_check
      _
    $region35: #{mlp_forward.1} parent=1 // pred_check_branch
      %63 = sbr.rel (0) target = $region37
    $region36: #{mlp_forward.1} parent=1 // pred_region
      %64 = dma.done [#allocation7], 1024
    $region37: #{mlp_forward.1} parent=1 // pred_fallthru
      _
    // Predicated region
    $region38: #{mlp_forward.1} parent=1 // pred_check
      _
    $region39: #{mlp_forward.1} parent=1 // pred_check_branch
      %66 = sbr.rel (0) target = $region41
    $region40: #{mlp_forward.1} parent=1 // pred_region
      %67 = dma.done [#allocation7], 1024
    $region41: #{mlp_forward.1} parent=1 // pred_fallthru
      _
    %v69 = vld [vmem:[%s0] sm:$0xf]
    %v70 = vld [vmem:[#allocation3] sm:$0xf]
    %v71 = vld [vmem:[#allocation3 + $0x4] sm:$0xf]
    %v72 = vld [vmem:[#allocation3 + $0x8] sm:$0xf]
    %v73 = vld [vmem:[#allocation3 + $0xc] sm:$0xf]
    %v74 = vld [vmem:[#allocation3 + $0x10] sm:$0xf]
    %v75 = vld [vmem:[#allocation3 + $0x14] sm:$0xf]
    %v76 = vld [vmem:[#allocation3 + $0x18] sm:$0xf]
    %v77 = vld [vmem:[#allocation3 + $0x1c] sm:$0xf]
    %v78 = vld [vmem:[#allocation3 + $0x20] sm:$0xf]
    %v79 = vld [vmem:[#allocation3 + $0x24] sm:$0xf]
    %v80 = vld [vmem:[#allocation3 + $0x28] sm:$0xf]
    %v81 = vld [vmem:[#allocation3 + $0x2c] sm:$0xf]
    %v82 = vld [vmem:[#allocation3 + $0x30] sm:$0xf]
    %v83 = vld [vmem:[#allocation3 + $0x34] sm:$0xf]
    %v84 = vld [vmem:[#allocation3 + $0x38] sm:$0xf]
    %v85 = vld [vmem:[#allocation3 + $0x3c] sm:$0xf]
    %v86 = vld [vmem:[%s2] sm:$0x1]
    %v88 = vlaneseq
    %v89 = vshrl.u32 %v88, 7
    %v90 = vsub.s32 0, %v89
    %v91 = vrot.slane %v86, %v90
    %v109 = vunpack.c.l.b16 %v70
    %v110 = vunpack.c.l.b16 %v71
    %v111 = vunpack.c.l.b16 %v72
    %v112 = vunpack.c.l.b16 %v73
    %v113 = vunpack.c.l.b16 %v74
    %v114 = vunpack.c.l.b16 %v75
    %v115 = vunpack.c.l.b16 %v76
    %v116 = vunpack.c.l.b16 %v77
    %v117 = vunpack.c.l.b16 %v78
    %v118 = vunpack.c.l.b16 %v79
    %v119 = vunpack.c.l.b16 %v80
    %v120 = vunpack.c.l.b16 %v81
    %v121 = vunpack.c.l.b16 %v82
    %v122 = vunpack.c.l.b16 %v83
    %v123 = vunpack.c.l.b16 %v84
    %v124 = vunpack.c.l.b16 %v85
    %v125 = vpack.c.b16 %v110, %v109
    %v126 = vpack.c.b16 %v112, %v111
    %v127 = vpack.c.b16 %v114, %v113
    %v128 = vpack.c.b16 %v116, %v115
    %v129 = vpack.c.b16 %v118, %v117
    %v130 = vpack.c.b16 %v120, %v119
    %v131 = vpack.c.b16 %v122, %v121
    %v132 = vpack.c.b16 %v124, %v123
    %141 = vmatprep.subr.bf16.mxu0 0
    %142 = vmatpush1.bf16.msra.mxu0 %v125
    %143 = vmatprep.subr.bf16.mxu0 0
    %144 = vmatpush1.bf16.msra.mxu0 %v126
    %145 = vmatprep.subr.bf16.mxu0 0
    %146 = vmatpush1.bf16.msra.mxu0 %v127
    %147 = vmatprep.subr.bf16.mxu0 0
    %148 = vmatpush1.bf16.msra.mxu0 %v128
    %149 = vmatprep.subr.bf16.mxu0 0
    %150 = vmatpush1.bf16.msra.mxu0 %v129
    %151 = vmatprep.subr.bf16.mxu0 0
    %152 = vmatpush1.bf16.msra.mxu0 %v130
    %153 = vmatprep.subr.bf16.mxu0 0
    %154 = vmatpush1.bf16.msra.mxu0 %v131
    %155 = vmatprep.subr.bf16.mxu0 0
    %156 = vmatpush1.bf16.msra.mxu0 %v132
    %157 = vmatprep.subr.bf16.mxu0 0
    %158 = vmatpush1.bf16.msra.mxu0 0
    %159 = vmatprep.subr.bf16.mxu0 0
    %160 = vmatpush1.bf16.msra.mxu0 0
    %161 = vmatprep.subr.bf16.mxu0 0
    %162 = vmatpush1.bf16.msra.mxu0 0
    %163 = vmatprep.subr.bf16.mxu0 0
    %164 = vmatpush1.bf16.msra.mxu0 0
    %165 = vmatprep.subr.bf16.mxu0 0
    %166 = vmatpush1.bf16.msra.mxu0 0
    %167 = vmatprep.subr.bf16.mxu0 0
    %168 = vmatpush1.bf16.msra.mxu0 0
    %169 = vmatprep.subr.bf16.mxu0 0
    %170 = vmatpush1.bf16.msra.mxu0 0
    %171 = vmatprep.subr.bf16.mxu0 0
    %172 = vmatpush1.bf16.msra.mxu0 0
    %173 = vmatprep.mubr.bf16.mxu0 0
    %174 = vmatmul.mubr.bf16.gmra.mrb[0].mxu0 %v69
    %v175 = vpop.f32.mrb[0].mxu0
    %v176 = vadd.f32 %v91, %v175
    %v177 = vpop.f32.mrb[0].mxu0
    %v178 = vpop.f32.mrb[0].mxu0
    %v179 = vpop.f32.mrb[0].mxu0
    %180 = vdwg.mxu0
    %v181 = vmax.f32 %v176, 0.0
    %v182 = vpack.c.bf16 %v181, %v181
    %183 = vst [vmem:[#allocation2] sm:$0xf] %v182
    %v184 = vld [vmem:[#allocation2] sm:$0xf]
    %v185 = vld [vmem:[#allocation6] sm:$0xf]
    %v186 = vld [vmem:[#allocation6 + $0x4] sm:$0xf]
    %v187 = vld [vmem:[#allocation6 + $0x8] sm:$0xf]
    %v188 = vld [vmem:[#allocation6 + $0xc] sm:$0xf]
    %v189 = vld [vmem:[#allocation6 + $0x10] sm:$0xf]
    %v190 = vld [vmem:[#allocation6 + $0x14] sm:$0xf]
    %v191 = vld [vmem:[#allocation6 + $0x18] sm:$0xf]
    %v192 = vld [vmem:[#allocation6 + $0x1c] sm:$0xf]
    %v193 = vld [vmem:[#allocation6 + $0x20] sm:$0xf]
    %v194 = vld [vmem:[#allocation6 + $0x24] sm:$0xf]
    %v195 = vld [vmem:[#allocation6 + $0x28] sm:$0xf]
    %v196 = vld [vmem:[#allocation6 + $0x2c] sm:$0xf]
    %v197 = vld [vmem:[#allocation6 + $0x30] sm:$0xf]
    %v198 = vld [vmem:[#allocation6 + $0x34] sm:$0xf]
    %v199 = vld [vmem:[#allocation6 + $0x38] sm:$0xf]
    %v200 = vld [vmem:[#allocation6 + $0x3c] sm:$0xf]
    %v201 = vld [vmem:[%s4] sm:$0x1]
    %v203 = vlaneseq
    %v204 = vshrl.u32 %v203, 7
    %v205 = vsub.s32 0, %v204
    %v206 = vrot.slane %v201, %v205
    %v224 = vunpack.c.l.b16 %v185
    %v225 = vunpack.c.l.b16 %v186
    %v226 = vunpack.c.l.b16 %v187
    %v227 = vunpack.c.l.b16 %v188
    %v228 = vunpack.c.l.b16 %v189
    %v229 = vunpack.c.l.b16 %v190
    %v230 = vunpack.c.l.b16 %v191
    %v231 = vunpack.c.l.b16 %v192
    %v232 = vunpack.c.l.b16 %v193
    %v233 = vunpack.c.l.b16 %v194
    %v234 = vunpack.c.l.b16 %v195
    %v235 = vunpack.c.l.b16 %v196
    %v236 = vunpack.c.l.b16 %v197
    %v237 = vunpack.c.l.b16 %v198
    %v238 = vunpack.c.l.b16 %v199
    %v239 = vunpack.c.l.b16 %v200
    %v240 = vpack.c.b16 %v225, %v224
    %v241 = vpack.c.b16 %v227, %v226
    %v242 = vpack.c.b16 %v229, %v228
    %v243 = vpack.c.b16 %v231, %v230
    %v244 = vpack.c.b16 %v233, %v232
    %v245 = vpack.c.b16 %v235, %v234
    %v246 = vpack.c.b16 %v237, %v236
    %v247 = vpack.c.b16 %v239, %v238
    %256 = vmatprep.subr.bf16.mxu0 0
    %257 = vmatpush1.bf16.msra.mxu0 %v240
    %258 = vmatprep.subr.bf16.mxu0 0
    %259 = vmatpush1.bf16.msra.mxu0 %v241
    %260 = vmatprep.subr.bf16.mxu0 0
    %261 = vmatpush1.bf16.msra.mxu0 %v242
    %262 = vmatprep.subr.bf16.mxu0 0
    %263 = vmatpush1.bf16.msra.mxu0 %v243
    %264 = vmatprep.subr.bf16.mxu0 0
    %265 = vmatpush1.bf16.msra.mxu0 %v244
    %266 = vmatprep.subr.bf16.mxu0 0
    %267 = vmatpush1.bf16.msra.mxu0 %v245
    %268 = vmatprep.subr.bf16.mxu0 0
    %269 = vmatpush1.bf16.msra.mxu0 %v246
    %270 = vmatprep.subr.bf16.mxu0 0
    %271 = vmatpush1.bf16.msra.mxu0 %v247
    %272 = vmatprep.subr.bf16.mxu0 0
    %273 = vmatpush1.bf16.msra.mxu0 0
    %274 = vmatprep.subr.bf16.mxu0 0
    %275 = vmatpush1.bf16.msra.mxu0 0
    %276 = vmatprep.subr.bf16.mxu0 0
    %277 = vmatpush1.bf16.msra.mxu0 0
    %278 = vmatprep.subr.bf16.mxu0 0
    %279 = vmatpush1.bf16.msra.mxu0 0
    %280 = vmatprep.subr.bf16.mxu0 0
    %281 = vmatpush1.bf16.msra.mxu0 0
    %282 = vmatprep.subr.bf16.mxu0 0
    %283 = vmatpush1.bf16.msra.mxu0 0
    %284 = vmatprep.subr.bf16.mxu0 0
    %285 = vmatpush1.bf16.msra.mxu0 0
    %286 = vmatprep.subr.bf16.mxu0 0
    %287 = vmatpush1.bf16.msra.mxu0 0
    %288 = vmatprep.mubr.bf16.mxu0 0
    %289 = vmatmul.mubr.bf16.gmra.mrb[0].mxu0 %v184
    %v290 = vpop.f32.mrb[0].mxu0
    %v291 = vadd.f32 %v206, %v290
    %v292 = vpop.f32.mrb[0].mxu0
    %v293 = vpop.f32.mrb[0].mxu0
    %v294 = vpop.f32.mrb[0].mxu0
    %295 = vdwg.mxu0
    %v296 = vmax.f32 %v291, 0.0
    %v297 = vpack.c.bf16 %v296, %v296
    %298 = vst [vmem:[#allocation2] sm:$0xf] %v297
    %v299 = vld [vmem:[#allocation2] sm:$0xf]
    %v300 = vld [vmem:[#allocation8] sm:$0xf]
    %v301 = vld [vmem:[#allocation8 + $0x4] sm:$0xf]
    %v302 = vld [vmem:[#allocation8 + $0x8] sm:$0xf]
    %v303 = vld [vmem:[#allocation8 + $0xc] sm:$0xf]
    %v304 = vld [vmem:[#allocation8 + $0x10] sm:$0xf]
    %v305 = vld [vmem:[#allocation8 + $0x14] sm:$0xf]
    %v306 = vld [vmem:[#allocation8 + $0x18] sm:$0xf]
    %v307 = vld [vmem:[#allocation8 + $0x1c] sm:$0xf]
    %v308 = vld [vmem:[#allocation8 + $0x20] sm:$0xf]
    %v309 = vld [vmem:[#allocation8 + $0x24] sm:$0xf]
    %v310 = vld [vmem:[#allocation8 + $0x28] sm:$0xf]
    %v311 = vld [vmem:[#allocation8 + $0x2c] sm:$0xf]
    %v312 = vld [vmem:[#allocation8 + $0x30] sm:$0xf]
    %v313 = vld [vmem:[#allocation8 + $0x34] sm:$0xf]
    %v314 = vld [vmem:[#allocation8 + $0x38] sm:$0xf]
    %v315 = vld [vmem:[#allocation8 + $0x3c] sm:$0xf]
    %v316 = vld [vmem:[%s6] sm:$0x1]
    %v318 = vlaneseq
    %v319 = vshrl.u32 %v318, 7
    %v320 = vsub.s32 0, %v319
    %v321 = vrot.slane %v316, %v320
    %v339 = vunpack.c.l.b16 %v300
    %v340 = vunpack.c.l.b16 %v301
    %v341 = vunpack.c.l.b16 %v302
    %v342 = vunpack.c.l.b16 %v303
    %v343 = vunpack.c.l.b16 %v304
    %v344 = vunpack.c.l.b16 %v305
    %v345 = vunpack.c.l.b16 %v306
    %v346 = vunpack.c.l.b16 %v307
    %v347 = vunpack.c.l.b16 %v308
    %v348 = vunpack.c.l.b16 %v309
    %v349 = vunpack.c.l.b16 %v310
    %v350 = vunpack.c.l.b16 %v311
    %v351 = vunpack.c.l.b16 %v312
    %v352 = vunpack.c.l.b16 %v313
    %v353 = vunpack.c.l.b16 %v314
    %v354 = vunpack.c.l.b16 %v315
    %v355 = vpack.c.b16 %v340, %v339
    %v356 = vpack.c.b16 %v342, %v341
    %v357 = vpack.c.b16 %v344, %v343
    %v358 = vpack.c.b16 %v346, %v345
    %v359 = vpack.c.b16 %v348, %v347
    %v360 = vpack.c.b16 %v350, %v349
    %v361 = vpack.c.b16 %v352, %v351
    %v362 = vpack.c.b16 %v354, %v353
    %371 = vmatprep.subr.bf16.mxu0 0
    %372 = vmatpush1.bf16.msra.mxu0 %v355
    %373 = vmatprep.subr.bf16.mxu0 0
    %374 = vmatpush1.bf16.msra.mxu0 %v356
    %375 = vmatprep.subr.bf16.mxu0 0
    %376 = vmatpush1.bf16.msra.mxu0 %v357
    %377 = vmatprep.subr.bf16.mxu0 0
    %378 = vmatpush1.bf16.msra.mxu0 %v358
    %379 = vmatprep.subr.bf16.mxu0 0
    %380 = vmatpush1.bf16.msra.mxu0 %v359
    %381 = vmatprep.subr.bf16.mxu0 0
    %382 = vmatpush1.bf16.msra.mxu0 %v360
    %383 = vmatprep.subr.bf16.mxu0 0
    %384 = vmatpush1.bf16.msra.mxu0 %v361
    %385 = vmatprep.subr.bf16.mxu0 0
    %386 = vmatpush1.bf16.msra.mxu0 %v362
    %387 = vmatprep.subr.bf16.mxu0 0
    %388 = vmatpush1.bf16.msra.mxu0 0
    %389 = vmatprep.subr.bf16.mxu0 0
    %390 = vmatpush1.bf16.msra.mxu0 0
    %391 = vmatprep.subr.bf16.mxu0 0
    %392 = vmatpush1.bf16.msra.mxu0 0
    %393 = vmatprep.subr.bf16.mxu0 0
    %394 = vmatpush1.bf16.msra.mxu0 0
    %395 = vmatprep.subr.bf16.mxu0 0
    %396 = vmatpush1.bf16.msra.mxu0 0
    %397 = vmatprep.subr.bf16.mxu0 0
    %398 = vmatpush1.bf16.msra.mxu0 0
    %399 = vmatprep.subr.bf16.mxu0 0
    %400 = vmatpush1.bf16.msra.mxu0 0
    %401 = vmatprep.subr.bf16.mxu0 0
    %402 = vmatpush1.bf16.msra.mxu0 0
    %403 = vmatprep.mubr.bf16.mxu0 0
    %404 = vmatmul.mubr.bf16.gmra.mrb[0].mxu0 %v299
    %v405 = vpop.f32.mrb[0].mxu0
    %v406 = vadd.f32 %v321, %v405
    %v407 = vpop.f32.mrb[0].mxu0
    %v408 = vpop.f32.mrb[0].mxu0
    %v409 = vpop.f32.mrb[0].mxu0
    %410 = vdwg.mxu0
    %411 = vst [vmem:[#allocation9] sm:$0xff] %v406
    // Predicated region
    $region42: #{mlp_forward.1} parent=1 // pred_check
      _
    $region43: #{mlp_forward.1} parent=1 // pred_check_branch
      %413 = sbr.rel (0) target = $region45
    $region44: #{mlp_forward.1} parent=1 // pred_region
      %s415 = ssub.s32 128, 128
      %416 = vsyncadd [#allocation5], %s415
      %s418 = sshll.u32 [#allocation9], 4
      %s419 = int_to_ptr.vmem [resolvable:$true] %s418
      %421 = dma.vmem_to_hbm [thread:$0]  %s419, 128, %s7, [#allocation5]
    $region45: #{mlp_forward.1} parent=1 // pred_fallthru
      _
    // Predicated region
    $region46: #{mlp_forward.1} parent=1 // pred_check
      _
    $region47: #{mlp_forward.1} parent=1 // pred_check_branch
      %423 = sbr.rel (0) target = $region49
    $region48: #{mlp_forward.1} parent=1 // pred_region
      %424 = dma.done [#allocation5], 128
    $region49: #{mlp_forward.1} parent=1 // pred_fallthru
      _
    %425 = vsyncpa [#allocation4], 1
    %426 = vsyncpa [#allocation7], 1
    %427 = vsyncpa [#allocation5], 1

</llo_original>
